<compile_context>
chip_gen: v7x
topology: tpu7x:2x2x1
jax: 0.10.0
libtpu: 0.0.40
codegen_flags: <defaults>
</compile_context>

<pallas_src>
import jax
import jax.numpy as jnp
from jax.experimental import pallas as pl
from jax.experimental.pallas import tpu as pltpu


def _global_concat_attn_pool_kernel(x_ref, w_ref, avg_ref, max_ref, attn_ref):
    # x_ref block: (TN, C, S) with S = H*W on the lane axis.
    # w_ref block: (C, 1) 1x1-conv attention weight (C on sublanes).
    x = x_ref[...]                                   # (TN, C, S), input dtype
    s = x.shape[-1]
    inv_s = jnp.float32(1.0 / s)                     # trace-time constant -> VPU mul

    # Global average pool: f32 accumulation over the lane axis, then * 1/S.
    sum_hw = jnp.sum(x, axis=-1, dtype=jnp.float32)  # (TN, C)
    avg_ref[...] = (sum_hw * inv_s).astype(avg_ref.dtype)

    # Global max pool: stays in input dtype (matches F.max_pool2d).
    max_ref[...] = jnp.max(x, axis=-1).astype(max_ref.dtype)

    # Attention pool: a = sigmoid(sum_c w[c] * x[:, c, :]) ; out = sum_s x * a.
    w = w_ref[...]                                   # (C, 1)
    logits = jnp.sum(x * w[None, :, :], axis=1, dtype=jnp.float32)   # (TN, S)
    attn_map = jax.nn.sigmoid(logits)                                 # (TN, S), EUP
    weighted = x * attn_map[:, None, :].astype(x.dtype)               # (TN, C, S)
    attn = jnp.sum(weighted, axis=-1, dtype=jnp.float32)              # (TN, C)
    attn_ref[...] = attn.astype(attn_ref.dtype)


def _choose_tn(n, c, s, itemsize, budget_bytes=8 * 1024 * 1024):
    """Largest per-step sample count whose double-buffered block fits the budget."""
    per_sample = max(1, c * s * itemsize * 2)        # x block, double buffered
    cap = max(1, budget_bytes // per_sample)
    if cap >= n:
        return n
    # Prefer a divisor of n that keeps the output store sublane-dense (mult. of 8).
    for tn in range(min(cap, n), 0, -1):
        if n % tn == 0 and tn % 8 == 0:
            return tn
    for tn in range(min(cap, n), 0, -1):
        if n % tn == 0:
            return tn
    return 1


def global_concat_attn_pool2d(x: jax.Array, attn_weight: jax.Array) -> jax.Array:
    """Pallas implementation of catalyst GlobalConcatAttnPool2d (NCHW input).

    attn_weight: the 1x1 conv weight of shape (1, C, 1, 1) (bias-free), Sigmoid gate.
    Returns (N, 3*C, 1, 1): [avg | max | attn] along channels.
    """
    N, C, H, W = x.shape
    S = H * W
    itemsize = jnp.dtype(x.dtype).itemsize

    x3 = x.reshape(N, C, S)                          # free view for contiguous NCHW
    w = attn_weight.reshape(C, 1).astype(x.dtype)    # (C, 1), C on sublanes in-kernel

    TN = _choose_tn(N, C, S, itemsize)
    grid = (N // TN,)
    # TODO(synk): channel tiling for extremely large C*H*W blocks is not implemented
    # (the attention map needs all channels per spatial position); TN=1 is the floor.

    cost = pl.CostEstimate(
        flops=7 * N * C * S,                         # avg + max + attn-map + weighted sum
        transcendentals=N * S,                       # sigmoid
        bytes_accessed=N * C * S * itemsize + 3 * N * C * itemsize + C * itemsize,
    )

    avg, mx, attn = pl.pallas_call(
        _global_concat_attn_pool_kernel,
        out_shape=[
            jax.ShapeDtypeStruct((N, C), x.dtype),   # avg
            jax.ShapeDtypeStruct((N, C), x.dtype),   # max
            jax.ShapeDtypeStruct((N, C), x.dtype),   # attn
        ],
        grid=grid,
        in_specs=[
            pl.BlockSpec((TN, C, S), lambda n: (n, 0, 0)),
            pl.BlockSpec((C, 1), lambda n: (0, 0)),
        ],
        out_specs=[
            pl.BlockSpec((TN, C), lambda n: (n, 0)),
            pl.BlockSpec((TN, C), lambda n: (n, 0)),
            pl.BlockSpec((TN, C), lambda n: (n, 0)),
        ],
        compiler_params=pltpu.CompilerParams(
            dimension_semantics=("parallel",),
        ),
        cost_estimate=cost,
    )(x3, w)

    out = jnp.concatenate([avg, mx, attn], axis=1)   # tiny; wrapper concat is free
    return out.reshape(N, 3 * C, 1, 1)


if __name__ == "__main__":
    key = jax.random.PRNGKey(0)
    kx, kw = jax.random.split(key)

    N, C, H, W = 2, 4, 16, 16
    x = jax.random.normal(kx, (N, C, H, W), dtype=jnp.float32)
    # 1x1 conv weight of the attention branch (Conv2d(C, 1, 1, bias=False)).
    attn_w = jax.random.normal(kw, (1, C, 1, 1), dtype=jnp.float32)

    y = jax.block_until_ready(global_concat_attn_pool2d(x, attn_w))

    # Pure-JAX reference: avg ++ max ++ attn (Sigmoid-gated weighted spatial sum).
    avg_ref = jnp.mean(x, axis=(2, 3), keepdims=True)
    max_ref = jnp.max(x, axis=(2, 3), keepdims=True)
    gate = jax.nn.sigmoid(jnp.einsum("nchw,c->nhw", x, attn_w.reshape(C)))
    attn_ref = jnp.sum(x * gate[:, None, :, :], axis=(2, 3), keepdims=True)
    ref = jnp.concatenate([avg_ref, max_ref, attn_ref], axis=1)

    assert y.shape == (N, 3 * C, 1, 1), y.shape
    assert jnp.allclose(y, ref, atol=1e-4, rtol=1e-4), jnp.max(jnp.abs(y - ref))

    print("KERNEL_OK")
</pallas_src>

<mosaic_0001>
module attributes {stable_mosaic.version = 11 : i64} {
  func.func @_global_concat_attn_pool_kernel(%arg0: i32, %arg1: memref<2x4x256xf32, #tpu.memory_space<vmem>>, %arg2: memref<4x1xf32, #tpu.memory_space<vmem>>, %arg3: memref<2x4xf32, #tpu.memory_space<vmem>>, %arg4: memref<2x4xf32, #tpu.memory_space<vmem>>, %arg5: memref<2x4xf32, #tpu.memory_space<vmem>>) attributes {dimension_semantics = [#tpu.dimension_semantics<parallel>], iteration_bounds = array<i64: 1>, scalar_prefetch = 0 : i64, scratch_operands = 0 : i64, tpu.core_type = #tpu.core_type<tc>, window_params = [{transform_indices = @transform_0, window_bounds = array<i64: 2, 4, 256>}, {pipeline_mode = #tpu.pipeline_mode<synchronous>, transform_indices = @transform_1, window_bounds = array<i64: 4, 1>}, {transform_indices = @transform_2, window_bounds = array<i64: 2, 4>}, {transform_indices = @transform_3, window_bounds = array<i64: 2, 4>}, {transform_indices = @transform_4, window_bounds = array<i64: 2, 4>}]} {
    %c0 = arith.constant 0 : index
    %c0_0 = arith.constant 0 : index
    %c0_1 = arith.constant 0 : index
    %0 = vector.load %arg1[%c0, %c0_0, %c0_1] : memref<2x4x256xf32, #tpu.memory_space<vmem>>, vector<2x4x256xf32>
    %cst = arith.constant dense<0.000000e+00> : vector<2x4xf32>
    %1 = vector.multi_reduction <add>, %0, %cst [2] : vector<2x4x256xf32> to vector<2x4xf32>
    %cst_2 = arith.constant 3.906250e-03 : f32
    %2 = vector.broadcast %cst_2 : f32 to vector<2x4xf32>
    %3 = arith.mulf %1, %2 : vector<2x4xf32>
    %c0_3 = arith.constant 0 : index
    %c0_4 = arith.constant 0 : index
    %4 = vector.load %arg3[%c0_3, %c0_4] : memref<2x4xf32, #tpu.memory_space<vmem>>, vector<2x4xf32>
    tpu.vector_store %arg3[%c0_3, %c0_4], %3 {strides = array<i32>} : memref<2x4xf32, #tpu.memory_space<vmem>>, vector<2x4xf32>,
    %cst_5 = arith.constant dense<0xFF800000> : vector<2x4xf32>
    %5 = vector.multi_reduction <maximumf>, %0, %cst_5 [2] : vector<2x4x256xf32> to vector<2x4xf32>
    %c0_6 = arith.constant 0 : index
    %c0_7 = arith.constant 0 : index
    %6 = vector.load %arg4[%c0_6, %c0_7] : memref<2x4xf32, #tpu.memory_space<vmem>>, vector<2x4xf32>
    tpu.vector_store %arg4[%c0_6, %c0_7], %5 {strides = array<i32>} : memref<2x4xf32, #tpu.memory_space<vmem>>, vector<2x4xf32>,
    %c0_8 = arith.constant 0 : index
    %c0_9 = arith.constant 0 : index
    %7 = vector.load %arg2[%c0_8, %c0_9] : memref<4x1xf32, #tpu.memory_space<vmem>>, vector<4x1xf32>
    %8 = vector.shape_cast %7 : vector<4x1xf32> to vector<1x4x1xf32>
    %9 = vector.broadcast %8 : vector<1x4x1xf32> to vector<2x4x256xf32>
    %10 = arith.mulf %0, %9 : vector<2x4x256xf32>
    %cst_10 = arith.constant dense<0.000000e+00> : vector<2x256xf32>
    %11 = vector.multi_reduction <add>, %10, %cst_10 [1] : vector<2x4x256xf32> to vector<2x256xf32>
    %12 = arith.negf %11 : vector<2x256xf32>
    %13 = math.exp %12 : vector<2x256xf32>
    %cst_11 = arith.constant 1.000000e+00 : f32
    %14 = vector.broadcast %cst_11 : f32 to vector<2x256xf32>
    %15 = arith.addf %14, %13 : vector<2x256xf32>
    %16 = arith.divf %14, %15 : vector<2x256xf32>
    %17 = vector.shape_cast %16 : vector<2x256xf32> to vector<2x1x256xf32>
    %18 = vector.broadcast %17 : vector<2x1x256xf32> to vector<2x4x256xf32>
    %19 = arith.mulf %0, %18 : vector<2x4x256xf32>
    %cst_12 = arith.constant dense<0.000000e+00> : vector<2x4xf32>
    %20 = vector.multi_reduction <add>, %19, %cst_12 [2] : vector<2x4x256xf32> to vector<2x4xf32>
    %c0_13 = arith.constant 0 : index
    %c0_14 = arith.constant 0 : index
    %21 = vector.load %arg5[%c0_13, %c0_14] : memref<2x4xf32, #tpu.memory_space<vmem>>, vector<2x4xf32>
    tpu.vector_store %arg5[%c0_13, %c0_14], %20 {strides = array<i32>} : memref<2x4xf32, #tpu.memory_space<vmem>>, vector<2x4xf32>,
    return
  }
  func.func @transform_0(%arg0: i32) -> (i32, i32, i32) {
    %c0_i32 = arith.constant 0 : i32
    %c0_i32_0 = arith.constant 0 : i32
    %c0_i32_1 = arith.constant 0 : i32
    return %arg0, %c0_i32, %c0_i32_0 : i32, i32, i32
  }
  func.func @transform_1(%arg0: i32) -> (i32, i32) {
    %c0_i32 = arith.constant 0 : i32
    %c0_i32_0 = arith.constant 0 : i32
    %c0_i32_1 = arith.constant 0 : i32
    return %c0_i32, %c0_i32_0 : i32, i32
  }
  func.func @transform_2(%arg0: i32) -> (i32, i32) {
    %c0_i32 = arith.constant 0 : i32
    %c0_i32_0 = arith.constant 0 : i32
    return %arg0, %c0_i32 : i32, i32
  }
  func.func @transform_3(%arg0: i32) -> (i32, i32) {
    %c0_i32 = arith.constant 0 : i32
    %c0_i32_0 = arith.constant 0 : i32
    return %arg0, %c0_i32 : i32, i32
  }
  func.func @transform_4(%arg0: i32) -> (i32, i32) {
    %c0_i32 = arith.constant 0 : i32
    %c0_i32_0 = arith.constant 0 : i32
    return %arg0, %c0_i32 : i32, i32
  }
}

</mosaic_0001>

<llo_original>
// kernel: tpu_custom_call.1
$region0: #{tpu_custom_call.1}
  #allocation0 [shape = 'u32[]', space=smem, size = 0x4, offset = 0x4, fixed_abs, tag = 'smem constant byte address 0x4 - core index']
  #allocation1 [shape = 'u32[144,128]{1,0:T(1,128)}', space=vmem, size = 0x12000, scoped, tag = 'internal scratch']
  %s0 = inlined_call_operand.hbm [shape: f32[2,4,256], index: 0, kind: input, shape index: {}]
  %s1 = inlined_call_operand.vmem [shape: f32[4,1], index: 1, kind: input, shape index: {}]
  %s2 = inlined_call_operand.hbm [shape: f32[2,4], index: 2, kind: output, shape index: {0}]
  %s3 = inlined_call_operand.hbm [shape: f32[2,4], index: 3, kind: output, shape index: {1}]
  %s4 = inlined_call_operand.hbm [shape: f32[2,4], index: 4, kind: output, shape index: {2}]
  %5 = xla_tuple %s2, %s3, %s4
  %s6 = sld [smem:[#allocation0]]
  $region38: #{tpu_custom_call.1} parent=0
    _
  %s8 = ssub.s32 1, %s6
  %s9 = scalar_select 0, %s8, %s6
  $region1: #{tpu_custom_call.1} parent=0
    #allocation2 [shape = 'u8[8192]{0}', space=vmem, size = 0x2000, scoped, tag = 'input window, operand 0, single buffered']
    #allocation3 [shape = 's32[1]{0}', space=sflag, size = 0x4, scoped, tag = 'scoped memory for tpu_custom_call.1']
    #allocation4 [shape = 's32[1]{0}', space=sflag, size = 0x4, scoped, tag = 'scoped memory for tpu_custom_call.1']
    #allocation5 [shape = 'u8[1024]{0}', space=vmem, size = 0x400, scoped, tag = 'output window, operand 0, single buffered']
    #allocation6 [shape = 'u8[1024]{0}', space=vmem, size = 0x400, scoped, tag = 'output window, operand 1, single buffered']
    #allocation7 [shape = 's32[1]{0}', space=sflag, size = 0x4, scoped, tag = 'scoped memory for tpu_custom_call.1']
    #allocation8 [shape = 'u8[1024]{0}', space=vmem, size = 0x400, scoped, tag = 'output window, operand 2, single buffered']
    %10 = vsyncpa [#allocation3], 0
    %11 = vsyncpa [#allocation4], 0
    %12 = vsyncpa [#allocation7], 0
    // Predicated region
    $region2: #{tpu_custom_call.1} parent=1 // pred_check
      _
    $region3: #{tpu_custom_call.1} parent=1 // pred_check_branch
      %14 = sbr.rel (0) target = $region5
    $region4: #{tpu_custom_call.1} parent=1 // pred_region
      %s16 = ssub.s32 256, 256
      %17 = vsyncadd [#allocation3], %s16
      %s18 = sshll.u32 [#allocation2], 4
      %s19 = int_to_ptr.vmem [resolvable:$true] %s18
      %24 = dma.hbm_to_vmem [thread:$0]  %s0, 256, %s19, [#allocation3], 128, 128, 8
    $region5: #{tpu_custom_call.1} parent=1 // pred_fallthru
      _
    // Predicated region
    $region6: #{tpu_custom_call.1} parent=1 // pred_check
      _
    $region7: #{tpu_custom_call.1} parent=1 // pred_check_branch
      %26 = sbr.rel (0) target = $region9
    $region8: #{tpu_custom_call.1} parent=1 // pred_region
      _
    $region9: #{tpu_custom_call.1} parent=1 // pred_fallthru
      _
    // Predicated region
    $region10: #{tpu_custom_call.1} parent=1 // pred_check
      _
    $region11: #{tpu_custom_call.1} parent=1 // pred_check_branch
      %28 = sbr.rel (0) target = $region13
    $region12: #{tpu_custom_call.1} parent=1 // pred_region
      %29 = dma.done [#allocation3], 256
    $region13: #{tpu_custom_call.1} parent=1 // pred_fallthru
      _
    %v30 = vld [vmem:[#allocation2] sm:$0xff]
    %v31 = vld [vmem:[#allocation2 + $0x8] sm:$0xff]
    %v34 = vcombine.high %v30, %v30
    %v35 = vcombine.high %v31, %v31
    %vm38 = vcmask 1043456
    %v39 = vsel %vm38, %v30, 0.0
    %v40 = vsel %vm38, %v34, 0.0
    %v41 = vadd.f32 %v39, %v40
    %42 = vadd.xlane.f32.xlu0 %v41
    %v43 = vpop.xlane.xlu0 %42
    %v44 = vsel %vm38, %v31, 0.0
    %v45 = vsel %vm38, %v35, 0.0
    %v46 = vadd.f32 %v44, %v45
    %47 = vadd.xlane.f32.xlu0 %v46
    %v48 = vpop.xlane.xlu0 %47
    %v49 = vmul.f32 %v43, 0.00390625
    %v50 = vmul.f32 %v48, 0.00390625
    %v53 = vlaneseq
    %v54 = vand.u32 %v53, 127
    %v55 = vlaneseq
    %v56 = vshrl.u32 %v55, 7
    %v57 = vsub.s32 %v54, %v56
    %v58 = vrot.slane %v49, %v57
    %v59 = vlaneseq
    %v60 = vshrl.u32 %v59, 7
    %v61 = vsub.s32 %v54, %v60
    %v62 = vrot.slane %v50, %v61
    %vm63 = vcmask 1041409
    %v64 = vsel %vm63, %v62, %v58
    %vm66 = vcmask 25600
    %67 = vst.msk [vmem:[#allocation5] sm:$0x3] %vm66, %v64
    %v68 = vsel %vm38, %v30, -inf
    %v69 = vsel %vm38, %v34, -inf
    %v70 = vmax.f32 %v68, %v69
    %71 = vmax.xlane.f32.xlu0 %v70
    %v72 = vpop.xlane.xlu0 %71
    %v73 = vsel %vm38, %v31, -inf
    %v74 = vsel %vm38, %v35, -inf
    %v75 = vmax.f32 %v73, %v74
    %76 = vmax.xlane.f32.xlu0 %v75
    %v77 = vpop.xlane.xlu0 %76
    %v80 = vlaneseq
    %v81 = vshrl.u32 %v80, 7
    %v82 = vsub.s32 %v54, %v81
    %v83 = vrot.slane %v72, %v82
    %v84 = vlaneseq
    %v85 = vshrl.u32 %v84, 7
    %v86 = vsub.s32 %v54, %v85
    %v87 = vrot.slane %v77, %v86
    %v88 = vsel %vm63, %v87, %v83
    %90 = vst.msk [vmem:[#allocation6] sm:$0x3] %vm66, %v88
    %v91 = vld [vmem:[%s1] sm:$0xf]
    %93 = vset.pattern.permute.xlu0 0
    %94 = vperm.xlu0 %93, %v91
    %v95 = vpop.permute.xlu0 %94
    %v97 = vunpack.c.l.s4 839922192
    %v98 = vunpack.c.0.s8 %v97
    %v99 = vlaneseq
    %v100 = vshrl.u32 %v99, 7
    %v101 = vsub.s32 %v98, %v100
    %v102 = vrot.slane %v95, %v101
    %v104 = vmul.f32 %v30, %v102
    %v105 = vmul.f32 %v31, %v102
    %v108 = vcombine.high %v104, %v104
    %v109 = vcombine.high %v105, %v105
    %v112 = vsel %vm38, %v104, 0.0
    %v113 = vrot.slane %v112, 4
    %v114 = vadd.f32 %v112, %v113
    %v115 = vrot.slane %v114, 2
    %v116 = vadd.f32 %v114, %v115
    %v117 = vrot.slane %v116, 1
    %v118 = vadd.f32 %v116, %v117
    %v119 = vsel %vm38, %v108, 0.0
    %v120 = vrot.slane %v119, 4
    %v121 = vadd.f32 %v119, %v120
    %v122 = vrot.slane %v121, 2
    %v123 = vadd.f32 %v121, %v122
    %v124 = vrot.slane %v123, 1
    %v125 = vadd.f32 %v123, %v124
    %v126 = vsel %vm38, %v105, 0.0
    %v127 = vrot.slane %v126, 4
    %v128 = vadd.f32 %v126, %v127
    %v129 = vrot.slane %v128, 2
    %v130 = vadd.f32 %v128, %v129
    %v131 = vrot.slane %v130, 1
    %v132 = vadd.f32 %v130, %v131
    %v133 = vsel %vm38, %v109, 0.0
    %v134 = vrot.slane %v133, 4
    %v135 = vadd.f32 %v133, %v134
    %v136 = vrot.slane %v135, 2
    %v137 = vadd.f32 %v135, %v136
    %v138 = vrot.slane %v137, 1
    %v139 = vadd.f32 %v137, %v138
    %v140 = vxor.u32 %v118, 2147483648
    %v141 = vxor.u32 %v125, 2147483648
    %v142 = vxor.u32 %v132, 2147483648
    %v143 = vxor.u32 %v139, 2147483648
    %v144 = vmul.f32 %v140, 1.442695
    %v145 = vpow.pop %v144
    %v146 = vmul.f32 %v141, 1.442695
    %v147 = vpow.pop %v146
    %v148 = vmul.f32 %v142, 1.442695
    %v149 = vpow.pop %v148
    %v150 = vmul.f32 %v143, 1.442695
    %v151 = vpow.pop %v150
    %v152 = vadd.f32 %v145, 1.0
    %v153 = vadd.f32 %v147, 1.0
    %v154 = vadd.f32 %v149, 1.0
    %v155 = vadd.f32 %v151, 1.0
    %v156 = vrcp.pop %v152
    %v157 = vmul.f32 1.0, %v156
    %v158 = vrcp.pop %v153
    %v159 = vmul.f32 1.0, %v158
    %v160 = vrcp.pop %v154
    %v161 = vmul.f32 1.0, %v160
    %v162 = vrcp.pop %v155
    %v163 = vmul.f32 1.0, %v162
    %v168 = vcombine.low %v157, %v159
    %v169 = vcombine.low %v161, %v163
    %v172 = vmul.f32 %v30, %v168
    %v173 = vmul.f32 %v31, %v169
    %v176 = vcombine.high %v172, %v172
    %v177 = vcombine.high %v173, %v173
    %v180 = vsel %vm38, %v172, 0.0
    %v181 = vsel %vm38, %v176, 0.0
    %v182 = vadd.f32 %v180, %v181
    %183 = vadd.xlane.f32.xlu0 %v182
    %v184 = vpop.xlane.xlu0 %183
    %v185 = vsel %vm38, %v173, 0.0
    %v186 = vsel %vm38, %v177, 0.0
    %v187 = vadd.f32 %v185, %v186
    %188 = vadd.xlane.f32.xlu0 %v187
    %v189 = vpop.xlane.xlu0 %188
    %v192 = vlaneseq
    %v193 = vshrl.u32 %v192, 7
    %v194 = vsub.s32 %v54, %v193
    %v195 = vrot.slane %v184, %v194
    %v196 = vlaneseq
    %v197 = vshrl.u32 %v196, 7
    %v198 = vsub.s32 %v54, %v197
    %v199 = vrot.slane %v189, %v198
    %v200 = vsel %vm63, %v199, %v195
    %202 = vst.msk [vmem:[#allocation8] sm:$0x3] %vm66, %v200
    // Predicated region
    $region14: #{tpu_custom_call.1} parent=1 // pred_check
      _
    $region15: #{tpu_custom_call.1} parent=1 // pred_check_branch
      %204 = sbr.rel (0) target = $region17
    $region16: #{tpu_custom_call.1} parent=1 // pred_region
      %s206 = ssub.s32 32, 32
      %207 = vsyncadd [#allocation4], %s206
      %s209 = sshll.u32 [#allocation5], 4
      %s210 = int_to_ptr.vmem [resolvable:$true] %s209
      %212 = dma.vmem_to_hbm [thread:$0]  %s210, 32, %s2, [#allocation4]
    $region17: #{tpu_custom_call.1} parent=1 // pred_fallthru
      _
    // Predicated region
    $region18: #{tpu_custom_call.1} parent=1 // pred_check
      _
    $region19: #{tpu_custom_call.1} parent=1 // pred_check_branch
      %214 = sbr.rel (0) target = $region21
    $region20: #{tpu_custom_call.1} parent=1 // pred_region
      %s216 = ssub.s32 32, 32
      %217 = vsyncadd [#allocation7], %s216
      %s219 = sshll.u32 [#allocation6], 4
      %s220 = int_to_ptr.vmem [resolvable:$true] %s219
      %222 = dma.vmem_to_hbm [thread:$0]  %s220, 32, %s3, [#allocation7]
    $region21: #{tpu_custom_call.1} parent=1 // pred_fallthru
      _
    // Predicated region
    $region22: #{tpu_custom_call.1} parent=1 // pred_check
      _
    $region23: #{tpu_custom_call.1} parent=1 // pred_check_branch
      %224 = sbr.rel (0) target = $region25
    $region24: #{tpu_custom_call.1} parent=1 // pred_region
      %s226 = ssub.s32 32, 32
      %227 = vsyncadd [#allocation7], %s226
      %s229 = sshll.u32 [#allocation8], 4
      %s230 = int_to_ptr.vmem [resolvable:$true] %s229
      %232 = dma.vmem_to_hbm [thread:$0]  %s230, 32, %s4, [#allocation7]
    $region25: #{tpu_custom_call.1} parent=1 // pred_fallthru
      _
    // Predicated region
    $region26: #{tpu_custom_call.1} parent=1 // pred_check
      _
    $region27: #{tpu_custom_call.1} parent=1 // pred_check_branch
      %234 = sbr.rel (0) target = $region29
    $region28: #{tpu_custom_call.1} parent=1 // pred_region
      %235 = dma.done [#allocation4], 32
    $region29: #{tpu_custom_call.1} parent=1 // pred_fallthru
      _
    // Predicated region
    $region30: #{tpu_custom_call.1} parent=1 // pred_check
      _
    $region31: #{tpu_custom_call.1} parent=1 // pred_check_branch
      %237 = sbr.rel (0) target = $region33
    $region32: #{tpu_custom_call.1} parent=1 // pred_region
      %238 = dma.done [#allocation7], 32
    $region33: #{tpu_custom_call.1} parent=1 // pred_fallthru
      _
    // Predicated region
    $region34: #{tpu_custom_call.1} parent=1 // pred_check
      _
    $region35: #{tpu_custom_call.1} parent=1 // pred_check_branch
      %240 = sbr.rel (0) target = $region37
    $region36: #{tpu_custom_call.1} parent=1 // pred_region
      %241 = dma.done [#allocation7], 32
    $region37: #{tpu_custom_call.1} parent=1 // pred_fallthru
      _
    %242 = vsyncpa [#allocation3], 1
    %243 = vsyncpa [#allocation4], 1
    %244 = vsyncpa [#allocation7], 1

</llo_original>
